<compile_context>
chip_gen: v6e
topology: v6e:2x2x1
jax: 0.10.0
libtpu: 0.0.40
codegen_flags: <defaults>
</compile_context>

<pallas_src>
import functools

import jax
import jax.numpy as jnp
from jax.experimental import pallas as pl
from jax.experimental.pallas import tpu as pltpu

P_DROP = 0.3
LANE = 128
ROW = 16                                   # row-tile alignment (bf16 sublane tile)
_DROP_T = int(round(P_DROP * (1 << 32)))   # drop iff random bits < p * 2^32

# fallback-hash constants (used only when not running on a TPU backend)
_HC1, _HC2, _HC3, _HC4, _HC5 = 0x9E3779B1, 0x85EBCA77, 0xC2B2AE3D, 0x27D4EB2F, 0x165667B1


def _cdiv(a, b):
    return -(-a // b)


def _round_up(n, m):
    return (n + m - 1) // m * m


def _on_tpu():
    try:
        return jax.devices()[0].platform == "tpu"
    except Exception:
        return False


# ---------------------------------------------------------------------------
# In-kernel helpers
# ---------------------------------------------------------------------------
def _hidden(h_bf16, w_ref, b_ref):
    """relu(h @ W + b): bf16 MXU operands, f32 accumulation, result carried in bf16."""
    acc = jnp.dot(h_bf16, w_ref[...], preferred_element_type=jnp.float32) + b_ref[...]
    return jnp.maximum(acc.astype(jnp.bfloat16), 0)


def _exit(h_bf16, w_ref, b_ref, relu):
    """Exit head: f32 result (cast to the output dtype at the store)."""
    acc = jnp.dot(h_bf16, w_ref[...], preferred_element_type=jnp.float32) + b_ref[...]
    return jnp.maximum(acc, 0.0) if relu else acc


def _hw_bits(shape):
    bits = pltpu.prng_random_bits(shape)
    if bits.dtype != jnp.uint32:
        bits = pltpu.bitcast(bits, jnp.uint32)
    return bits


def _make_bits_fn(seed_ref, use_hw_prng, rows, max_w):
    """Returns bits(shape, salt) -> uint32 random bits for one dropout mask."""
    if use_hw_prng:
        # Seed once per grid step; each prng_random_bits call advances the stream.
        pltpu.prng_seed(seed_ref[0] + pl.program_id(0) * jnp.int32(7919))
        return lambda shape, salt: _hw_bits(shape)

    # Non-TPU fallback: stateless integer hash, affine base hoisted and shared across layers.
    seed = (seed_ref[0] + pl.program_id(0) * jnp.int32(1000003)).astype(jnp.uint32)
    r = jax.lax.broadcasted_iota(jnp.uint32, (rows, max_w), 0)
    c = jax.lax.broadcasted_iota(jnp.uint32, (rows, max_w), 1)
    base = r * jnp.uint32(_HC1) + c * jnp.uint32(_HC2) + seed

    def bits(shape, salt):
        x = base[:, :shape[1]] + jnp.uint32((salt * _HC3) & 0xFFFFFFFF)
        x = x ^ (x >> 15)
        x = x * jnp.uint32(_HC4)
        x = x ^ (x >> 13)
        x = x * jnp.uint32(_HC5)
        return x ^ (x >> 16)

    return bits


def _drop(h, bits_u32):
    """Zero ~p of h (the 1/(1-p) rescale is pre-folded into the next layer's weights)."""
    return jnp.where(bits_u32 >= jnp.uint32(_DROP_T), h, jnp.zeros_like(h))


# ---------------------------------------------------------------------------
# lstm=True branch:  in -> 500 -> 250 -> 100 -> 50 -> 2   (padded: 512/256/128/128/128)
# ---------------------------------------------------------------------------
def _lstm_branch_kernel(seed_ref, x_ref,
                        w1, b1, w2, b2, w3, b3, w4, b4, we, be,
                        out_ref, *, apply_dropout, use_hw_prng):
    h = x_ref[...].astype(jnp.bfloat16)
    if apply_dropout:
        bits = _make_bits_fn(seed_ref, use_hw_prng, h.shape[0], 512)
    for salt, (w, b) in enumerate(((w1, b1), (w2, b2), (w3, b3), (w4, b4)), start=1):
        h = _hidden(h, w, b)
        if apply_dropout:
            h = _drop(h, bits(h.shape, salt))
    out_ref[...] = _exit(h, we, be, relu=False).astype(out_ref.dtype)   # no ReLU on exit


# ---------------------------------------------------------------------------
# lstm=False branch:  192 -> 75 -> 30 -> {exit:2 | 10} -> exit:2
#   linear_2_exit and linear_3 are fused into one (128, 256) weight (wf / bf);
#   linear_3_exit's weight columns are pre-shifted to lanes 2:4, so both heads
#   pack into a single lane-dense (tile_b, 128) output with a plain add.
# ---------------------------------------------------------------------------
def _mlp_branch_kernel(seed_ref, x_ref,
                       w1, b1, w2, b2, wf, bf, w3e, b3e,
                       out_ref, *, apply_dropout, use_hw_prng):
    h = x_ref[...].astype(jnp.bfloat16)
    if apply_dropout:
        bits = _make_bits_fn(seed_ref, use_hw_prng, h.shape[0], LANE)
    h = _hidden(h, w1, b1)                        # relu(linear_1(x))
    if apply_dropout:
        h = _drop(h, bits(h.shape, 11))
    h = _hidden(h, w2, b2)                        # relu(linear_2(x))
    if apply_dropout:
        h = _drop(h, bits(h.shape, 12))
    # fused relu([linear_2_exit | linear_3](x)) -- one MXU pass feeds both heads
    f = jnp.maximum(jnp.dot(h, wf[...], preferred_element_type=jnp.float32) + bf[...], 0.0)
    y = f[:, :LANE]                               # relu(linear_2_exit(x)), lanes 0:2 valid
    h3 = f[:, LANE:].astype(jnp.bfloat16)         # relu(linear_3(x)),      lanes 0:10 valid
    if apply_dropout:
        h3 = _drop(h3, bits(h3.shape, 13))
    z = _exit(h3, w3e, b3e, relu=True)            # relu(linear_3_exit(x)), lanes 2:4 valid
    out_ref[...] = (y + z).astype(out_ref.dtype)  # packed: lanes 0:2 = y, lanes 2:4 = z


# ---------------------------------------------------------------------------
# Parameters: PyTorch-style init, then a one-time "prepare" into kernel layout
# ---------------------------------------------------------------------------
def _init_linear(key, in_f, out_f):
    kw, kb = jax.random.split(key)
    bound = 1.0 / (in_f ** 0.5)
    w = jax.random.uniform(kw, (in_f, out_f), jnp.float32, -bound, bound)
    b = jax.random.uniform(kb, (out_f,), jnp.float32, -bound, bound)
    return w, b


def init_params(key, embedding_size, hidden_size):
    in_dim = embedding_size + 2 * hidden_size
    lstm_shapes = [(in_dim, 500), (500, 250), (250, 100), (100, 50), (50, 2)]
    mlp_shapes = [(192, 75), (75, 30), (30, 2), (30, 10), (10, 2)]
    keys = jax.random.split(key, len(lstm_shapes) + len(mlp_shapes))
    lstm_raw = [_init_linear(k, i, o) for k, (i, o) in zip(keys[:5], lstm_shapes)]
    mlp_raw = [_init_linear(k, i, o) for k, (i, o) in zip(keys[5:], mlp_shapes)]
    return lstm_raw, mlp_raw


def _pad_weight(w, in_pad, out_pad, scale=1.0, lane_shift=0):
    w = (w * scale).astype(jnp.bfloat16)
    return jnp.pad(w, ((0, in_pad - w.shape[0]),
                       (lane_shift, out_pad - lane_shift - w.shape[1])))


def _pad_bias(b, out_pad, lane_shift=0):
    return jnp.pad(b, (lane_shift, out_pad - lane_shift - b.shape[0])) \
              .reshape(1, out_pad).astype(jnp.float32)


def prepare_params(lstm_raw, mlp_raw, apply_dropout=True):
    """Kernel layout: bf16 weights zero-padded to 128-lane multiples, f32 (1, out) biases,
    1/(1-p) rescale folded into every weight consuming a dropped activation, linear_2_exit /
    linear_3 fused into one (128, 256) weight, and linear_3_exit shifted to lanes 2:4 so the
    two mlp heads pack into one output slab."""
    s = 1.0 / (1.0 - P_DROP) if apply_dropout else 1.0

    # lstm branch
    out_pads = [512, 256, 128, 128, 128]
    lstm_params = []
    in_pad = lstm_raw[0][0].shape[0]
    for k, (w, b) in enumerate(lstm_raw):
        lstm_params.append(_pad_weight(w, in_pad, out_pads[k], s if k > 0 else 1.0))
        lstm_params.append(_pad_bias(b, out_pads[k]))
        in_pad = out_pads[k]

    # mlp branch
    (w1, b1), (w2, b2), (w2e, b2e), (w3, b3), (w3e, b3e) = mlp_raw
    wf = jnp.concatenate([_pad_weight(w2e, 128, 128, s),
                          _pad_weight(w3, 128, 128, s)], axis=1)        # (128, 256)
    bf_ = jnp.concatenate([_pad_bias(b2e, 128), _pad_bias(b3, 128)], axis=1)
    mlp_params = [
        _pad_weight(w1, w1.shape[0], 128), _pad_bias(b1, 128),
        _pad_weight(w2, 128, 128, s), _pad_bias(b2, 128),
        wf, bf_,
        _pad_weight(w3e, 128, 128, s, lane_shift=2), _pad_bias(b3e, 128, lane_shift=2),
    ]
    return {"lstm": lstm_params, "mlp": mlp_params, "dropout_scaled": apply_dropout}


# ---------------------------------------------------------------------------
# Wrapper
# ---------------------------------------------------------------------------
def stackoverflow_policy_net(x, params, *, lstm=True, apply_dropout=True, seed=0,
                             max_tile_b=1024):
    """Params must come from prepare_params(..., apply_dropout=<same flag>)."""
    assert params["dropout_scaled"] == apply_dropout, (
        "params prepared with a different apply_dropout flag: the 1/(1-p) rescale is folded "
        "into the weights at prepare_params() time")
    x = x.astype(jnp.float32)
    B, D = x.shape
    # >=2 grid steps for moderate batches (so both v7x TensorCores get work), capped at
    # max_tile_b so large batches still amortize the per-grid-step overhead.
    tile_b = min(_round_up(max_tile_b, ROW), max(ROW, _round_up(_cdiv(B, 2), ROW)))
    Bp = _round_up(B, tile_b)
    if Bp != B:
        x = jnp.pad(x, ((0, Bp - B), (0, 0)))
    grid = (Bp // tile_b,)

    use_hw_prng = apply_dropout and _on_tpu()
    seed_arr = jnp.array([seed], dtype=jnp.int32)
    smem_spec = pl.BlockSpec(memory_space=pltpu.MemorySpace.SMEM)
    x_spec = pl.BlockSpec((tile_b, D), lambda i: (i, 0))
    out_spec = pl.BlockSpec((tile_b, LANE), lambda i: (i, 0))
    resident = lambda p: pl.BlockSpec(p.shape, lambda i: (0, 0))   # weights stay VMEM-resident
    compiler_params = pltpu.CompilerParams(dimension_semantics=("parallel",))

    weights = params["lstm"] if lstm else params["mlp"]
    kernel_fn = _lstm_branch_kernel if lstm else _mlp_branch_kernel
    kernel = functools.partial(kernel_fn, apply_dropout=apply_dropout,
                               use_hw_prng=use_hw_prng)
    out = pl.pallas_call(
        kernel,
        grid=grid,
        out_shape=jax.ShapeDtypeStruct((Bp, LANE), jnp.bfloat16),
        in_specs=[smem_spec, x_spec] + [resident(p) for p in weights],
        out_specs=out_spec,
        compiler_params=compiler_params,
    )(seed_arr, x, *weights)
    out = out.astype(jnp.float32)
    if lstm:
        return out[:B, :2]
    return out[:B, 0:2], out[:B, 2:4]


# ---------------------------------------------------------------------------
# Pure-JAX references (no dropout) mirroring the kernel numerics, for plumbing validation
# ---------------------------------------------------------------------------
def _ref_lstm(x, lstm_params):
    w1, b1, w2, b2, w3, b3, w4, b4, we, be = lstm_params
    h = x.astype(jnp.bfloat16)
    for w, b in ((w1, b1), (w2, b2), (w3, b3), (w4, b4)):
        acc = jnp.dot(h, w, preferred_element_type=jnp.float32) + b
        h = jnp.maximum(acc.astype(jnp.bfloat16), 0)
    out = jnp.dot(h, we, preferred_element_type=jnp.float32) + be
    return out[:, :2]


def _ref_mlp(x, mlp_params):
    w1, b1, w2, b2, wf, bf_, w3e, b3e = mlp_params
    h = x.astype(jnp.bfloat16)
    for w, b in ((w1, b1), (w2, b2)):
        acc = jnp.dot(h, w, preferred_element_type=jnp.float32) + b
        h = jnp.maximum(acc.astype(jnp.bfloat16), 0)
    f = jnp.maximum(jnp.dot(h, wf, preferred_element_type=jnp.float32) + bf_, 0.0)
    y = f[:, :LANE]
    h3 = f[:, LANE:].astype(jnp.bfloat16)
    z = jnp.maximum(jnp.dot(h3, w3e, preferred_element_type=jnp.float32) + b3e, 0.0)
    return y[:, :2], z[:, 2:4]     # linear_3_exit is pre-shifted to lanes 2:4


if __name__ == "__main__":
    # Shapes consistent with the module: embedding_size=32, hidden_size=32
    #   lstm branch input dim = 32 + 2*32 = 96 ; mlp branch input dim = 192
    embedding_size, hidden_size, batch = 32, 32, 8

    key = jax.random.PRNGKey(0)
    kp, kx1, kx2 = jax.random.split(key, 3)
    lstm_raw, mlp_raw = init_params(kp, embedding_size, hidden_size)

    x_lstm = jax.random.normal(kx1, (batch, embedding_size + 2 * hidden_size), jnp.float32)
    x_mlp = jax.random.normal(kx2, (batch, 192), jnp.float32)

    # Deterministic (no-dropout) run: validates matmul / padding / head-fusion / packing.
    params_eval = prepare_params(lstm_raw, mlp_raw, apply_dropout=False)
    out_eval = stackoverflow_policy_net(x_lstm, params_eval, lstm=True, apply_dropout=False)
    y_eval, z_eval = stackoverflow_policy_net(x_mlp, params_eval, lstm=False,
                                              apply_dropout=False)
    assert jnp.allclose(out_eval, _ref_lstm(x_lstm, params_eval["lstm"]), atol=2e-2, rtol=2e-2)
    ref_y, ref_z = _ref_mlp(x_mlp, params_eval["mlp"])
    assert jnp.allclose(y_eval, ref_y, atol=2e-2, rtol=2e-2)
    assert jnp.allclose(z_eval, ref_z, atol=2e-2, rtol=2e-2)

    # Training-mode run (F.dropout defaults to training=True, matching the PyTorch module).
    params_tr = prepare_params(lstm_raw, mlp_raw, apply_dropout=True)
    out_tr = stackoverflow_policy_net(x_lstm, params_tr, lstm=True,
                                      apply_dropout=True, seed=1)
    y_tr, z_tr = stackoverflow_policy_net(x_mlp, params_tr, lstm=False,
                                          apply_dropout=True, seed=2)

    jax.block_until_ready((out_eval, y_eval, z_eval, out_tr, y_tr, z_tr))
    assert out_tr.shape == (batch, 2) and y_tr.shape == (batch, 2) and z_tr.shape == (batch, 2)
    assert bool(jnp.all(jnp.isfinite(out_tr))) and bool(jnp.all(jnp.isfinite(y_tr)))
    assert bool(jnp.all(jnp.isfinite(z_tr)))
    print("KERNEL_OK")
</pallas_src>

<mosaic_0001>
module attributes {stable_mosaic.version = 11 : i64} {
  func.func @_lstm_branch_kernel(%arg0: i32, %arg1: memref<1xi32, #tpu.memory_space<smem>>, %arg2: memref<16x96xf32, #tpu.memory_space<vmem>>, %arg3: memref<96x512xbf16, #tpu.memory_space<vmem>>, %arg4: memref<1x512xf32, #tpu.memory_space<vmem>>, %arg5: memref<512x256xbf16, #tpu.memory_space<vmem>>, %arg6: memref<1x256xf32, #tpu.memory_space<vmem>>, %arg7: memref<256x128xbf16, #tpu.memory_space<vmem>>, %arg8: memref<1x128xf32, #tpu.memory_space<vmem>>, %arg9: memref<128x128xbf16, #tpu.memory_space<vmem>>, %arg10: memref<1x128xf32, #tpu.memory_space<vmem>>, %arg11: memref<128x128xbf16, #tpu.memory_space<vmem>>, %arg12: memref<1x128xf32, #tpu.memory_space<vmem>>, %arg13: memref<16x128xbf16, #tpu.memory_space<vmem>>) attributes {dimension_semantics = [#tpu.dimension_semantics<parallel>], iteration_bounds = array<i64: 1>, scalar_prefetch = 0 : i64, scratch_operands = 0 : i64, tpu.core_type = #tpu.core_type<tc>, window_params = [{transform_indices = @transform_0, window_bounds = array<i64: 1>}, {transform_indices = @transform_1, window_bounds = array<i64: 16, 96>}, {pipeline_mode = #tpu.pipeline_mode<synchronous>, transform_indices = @transform_2, window_bounds = array<i64: 96, 512>}, {pipeline_mode = #tpu.pipeline_mode<synchronous>, transform_indices = @transform_3, window_bounds = array<i64: 1, 512>}, {pipeline_mode = #tpu.pipeline_mode<synchronous>, transform_indices = @transform_4, window_bounds = array<i64: 512, 256>}, {pipeline_mode = #tpu.pipeline_mode<synchronous>, transform_indices = @transform_5, window_bounds = array<i64: 1, 256>}, {pipeline_mode = #tpu.pipeline_mode<synchronous>, transform_indices = @transform_6, window_bounds = array<i64: 256, 128>}, {pipeline_mode = #tpu.pipeline_mode<synchronous>, transform_indices = @transform_7, window_bounds = array<i64: 1, 128>}, {pipeline_mode = #tpu.pipeline_mode<synchronous>, transform_indices = @transform_8, window_bounds = array<i64: 128, 128>}, {pipeline_mode = #tpu.pipeline_mode<synchronous>, transform_indices = @transform_9, window_bounds = array<i64: 1, 128>}, {pipeline_mode = #tpu.pipeline_mode<synchronous>, transform_indices = @transform_10, window_bounds = array<i64: 128, 128>}, {pipeline_mode = #tpu.pipeline_mode<synchronous>, transform_indices = @transform_11, window_bounds = array<i64: 1, 128>}, {transform_indices = @transform_12, window_bounds = array<i64: 16, 128>}]} {
    %c0 = arith.constant 0 : index
    %c0_0 = arith.constant 0 : index
    %0 = vector.load %arg2[%c0, %c0_0] : memref<16x96xf32, #tpu.memory_space<vmem>>, vector<16x96xf32>
    %1 = arith.truncf %0 : vector<16x96xf32> to vector<16x96xbf16>
    %c0_1 = arith.constant 0 : index
    %c0_2 = arith.constant 0 : index
    %2 = vector.load %arg3[%c0_1, %c0_2] : memref<96x512xbf16, #tpu.memory_space<vmem>>, vector<96x512xbf16>
    %cst = arith.constant dense<0.000000e+00> : vector<16x512xf32>
    %3 = tpu.matmul %1, %2, %cst {dimension_numbers = #tpu.dot_dimension_numbers<[1], [0], [0], [1], [0, 0, 1, 1], [], []>} : vector<16x96xbf16>, vector<96x512xbf16>, vector<16x512xf32> -> vector<16x512xf32>
    %c0_3 = arith.constant 0 : index
    %c0_4 = arith.constant 0 : index
    %4 = vector.load %arg4[%c0_3, %c0_4] : memref<1x512xf32, #tpu.memory_space<vmem>>, vector<1x512xf32>
    %5 = vector.broadcast %4 : vector<1x512xf32> to vector<16x512xf32>
    %6 = arith.addf %3, %5 : vector<16x512xf32>
    %7 = arith.truncf %6 : vector<16x512xf32> to vector<16x512xbf16>
    %cst_5 = arith.constant 0.000000e+00 : bf16
    %8 = vector.broadcast %cst_5 : bf16 to vector<16x512xbf16>
    %9 = arith.maximumf %7, %8 : vector<16x512xbf16>
    %c0_6 = arith.constant 0 : index
    %c0_7 = arith.constant 0 : index
    %10 = vector.load %arg5[%c0_6, %c0_7] : memref<512x256xbf16, #tpu.memory_space<vmem>>, vector<512x256xbf16>
    %cst_8 = arith.constant dense<0.000000e+00> : vector<16x256xf32>
    %11 = tpu.matmul %9, %10, %cst_8 {dimension_numbers = #tpu.dot_dimension_numbers<[1], [0], [0], [1], [0, 0, 1, 1], [], []>} : vector<16x512xbf16>, vector<512x256xbf16>, vector<16x256xf32> -> vector<16x256xf32>
    %c0_9 = arith.constant 0 : index
    %c0_10 = arith.constant 0 : index
    %12 = vector.load %arg6[%c0_9, %c0_10] : memref<1x256xf32, #tpu.memory_space<vmem>>, vector<1x256xf32>
    %13 = vector.broadcast %12 : vector<1x256xf32> to vector<16x256xf32>
    %14 = arith.addf %11, %13 : vector<16x256xf32>
    %15 = arith.truncf %14 : vector<16x256xf32> to vector<16x256xbf16>
    %cst_11 = arith.constant 0.000000e+00 : bf16
    %16 = vector.broadcast %cst_11 : bf16 to vector<16x256xbf16>
    %17 = arith.maximumf %15, %16 : vector<16x256xbf16>
    %c0_12 = arith.constant 0 : index
    %c0_13 = arith.constant 0 : index
    %18 = vector.load %arg7[%c0_12, %c0_13] : memref<256x128xbf16, #tpu.memory_space<vmem>>, vector<256x128xbf16>
    %cst_14 = arith.constant dense<0.000000e+00> : vector<16x128xf32>
    %19 = tpu.matmul %17, %18, %cst_14 {dimension_numbers = #tpu.dot_dimension_numbers<[1], [0], [0], [1], [0, 0, 1, 1], [], []>} : vector<16x256xbf16>, vector<256x128xbf16>, vector<16x128xf32> -> vector<16x128xf32>
    %c0_15 = arith.constant 0 : index
    %c0_16 = arith.constant 0 : index
    %20 = vector.load %arg8[%c0_15, %c0_16] : memref<1x128xf32, #tpu.memory_space<vmem>>, vector<1x128xf32>
    %21 = vector.broadcast %20 : vector<1x128xf32> to vector<16x128xf32>
    %22 = arith.addf %19, %21 : vector<16x128xf32>
    %23 = arith.truncf %22 : vector<16x128xf32> to vector<16x128xbf16>
    %cst_17 = arith.constant 0.000000e+00 : bf16
    %24 = vector.broadcast %cst_17 : bf16 to vector<16x128xbf16>
    %25 = arith.maximumf %23, %24 : vector<16x128xbf16>
    %c0_18 = arith.constant 0 : index
    %c0_19 = arith.constant 0 : index
    %26 = vector.load %arg9[%c0_18, %c0_19] : memref<128x128xbf16, #tpu.memory_space<vmem>>, vector<128x128xbf16>
    %cst_20 = arith.constant dense<0.000000e+00> : vector<16x128xf32>
    %27 = tpu.matmul %25, %26, %cst_20 {dimension_numbers = #tpu.dot_dimension_numbers<[1], [0], [0], [1], [0, 0, 1, 1], [], []>} : vector<16x128xbf16>, vector<128x128xbf16>, vector<16x128xf32> -> vector<16x128xf32>
    %c0_21 = arith.constant 0 : index
    %c0_22 = arith.constant 0 : index
    %28 = vector.load %arg10[%c0_21, %c0_22] : memref<1x128xf32, #tpu.memory_space<vmem>>, vector<1x128xf32>
    %29 = vector.broadcast %28 : vector<1x128xf32> to vector<16x128xf32>
    %30 = arith.addf %27, %29 : vector<16x128xf32>
    %31 = arith.truncf %30 : vector<16x128xf32> to vector<16x128xbf16>
    %cst_23 = arith.constant 0.000000e+00 : bf16
    %32 = vector.broadcast %cst_23 : bf16 to vector<16x128xbf16>
    %33 = arith.maximumf %31, %32 : vector<16x128xbf16>
    %c0_24 = arith.constant 0 : index
    %c0_25 = arith.constant 0 : index
    %34 = vector.load %arg11[%c0_24, %c0_25] : memref<128x128xbf16, #tpu.memory_space<vmem>>, vector<128x128xbf16>
    %cst_26 = arith.constant dense<0.000000e+00> : vector<16x128xf32>
    %35 = tpu.matmul %33, %34, %cst_26 {dimension_numbers = #tpu.dot_dimension_numbers<[1], [0], [0], [1], [0, 0, 1, 1], [], []>} : vector<16x128xbf16>, vector<128x128xbf16>, vector<16x128xf32> -> vector<16x128xf32>
    %c0_27 = arith.constant 0 : index
    %c0_28 = arith.constant 0 : index
    %36 = vector.load %arg12[%c0_27, %c0_28] : memref<1x128xf32, #tpu.memory_space<vmem>>, vector<1x128xf32>
    %37 = vector.broadcast %36 : vector<1x128xf32> to vector<16x128xf32>
    %38 = arith.addf %35, %37 : vector<16x128xf32>
    %39 = arith.truncf %38 : vector<16x128xf32> to vector<16x128xbf16>
    %c0_29 = arith.constant 0 : index
    %c0_30 = arith.constant 0 : index
    %40 = vector.load %arg13[%c0_29, %c0_30] : memref<16x128xbf16, #tpu.memory_space<vmem>>, vector<16x128xbf16>
    tpu.vector_store %arg13[%c0_29, %c0_30], %39 {strides = array<i32>} : memref<16x128xbf16, #tpu.memory_space<vmem>>, vector<16x128xbf16>,
    return
  }
  func.func @transform_0(%arg0: i32) -> i32 {
    %c0_i32 = arith.constant 0 : i32
    %c0_i32_0 = arith.constant 0 : i32
    return %c0_i32 : i32
  }
  func.func @transform_1(%arg0: i32) -> (i32, i32) {
    %c0_i32 = arith.constant 0 : i32
    %c0_i32_0 = arith.constant 0 : i32
    return %arg0, %c0_i32 : i32, i32
  }
  func.func @transform_2(%arg0: i32) -> (i32, i32) {
    %c0_i32 = arith.constant 0 : i32
    %c0_i32_0 = arith.constant 0 : i32
    %c0_i32_1 = arith.constant 0 : i32
    return %c0_i32, %c0_i32_0 : i32, i32
  }
  func.func @transform_3(%arg0: i32) -> (i32, i32) {
    %c0_i32 = arith.constant 0 : i32
    %c0_i32_0 = arith.constant 0 : i32
    %c0_i32_1 = arith.constant 0 : i32
    return %c0_i32, %c0_i32_0 : i32, i32
  }
  func.func @transform_4(%arg0: i32) -> (i32, i32) {
    %c0_i32 = arith.constant 0 : i32
    %c0_i32_0 = arith.constant 0 : i32
    %c0_i32_1 = arith.constant 0 : i32
    return %c0_i32, %c0_i32_0 : i32, i32
  }
  func.func @transform_5(%arg0: i32) -> (i32, i32) {
    %c0_i32 = arith.constant 0 : i32
    %c0_i32_0 = arith.constant 0 : i32
    %c0_i32_1 = arith.constant 0 : i32
    return %c0_i32, %c0_i32_0 : i32, i32
  }
  func.func @transform_6(%arg0: i32) -> (i32, i32) {
    %c0_i32 = arith.constant 0 : i32
    %c0_i32_0 = arith.constant 0 : i32
    %c0_i32_1 = arith.constant 0 : i32
    return %c0_i32, %c0_i32_0 : i32, i32
  }
  func.func @transform_7(%arg0: i32) -> (i32, i32) {
    %c0_i32 = arith.constant 0 : i32
    %c0_i32_0 = arith.constant 0 : i32
    %c0_i32_1 = arith.constant 0 : i32
    return %c0_i32, %c0_i32_0 : i32, i32
  }
  func.func @transform_8(%arg0: i32) -> (i32, i32) {
    %c0_i32 = arith.constant 0 : i32
    %c0_i32_0 = arith.constant 0 : i32
    %c0_i32_1 = arith.constant 0 : i32
    return %c0_i32, %c0_i32_0 : i32, i32
  }
  func.func @transform_9(%arg0: i32) -> (i32, i32) {
    %c0_i32 = arith.constant 0 : i32
    %c0_i32_0 = arith.constant 0 : i32
    %c0_i32_1 = arith.constant 0 : i32
    return %c0_i32, %c0_i32_0 : i32, i32
  }
  func.func @transform_10(%arg0: i32) -> (i32, i32) {
    %c0_i32 = arith.constant 0 : i32
    %c0_i32_0 = arith.constant 0 : i32
    %c0_i32_1 = arith.constant 0 : i32
    return %c0_i32, %c0_i32_0 : i32, i32
  }
  func.func @transform_11(%arg0: i32) -> (i32, i32) {
    %c0_i32 = arith.constant 0 : i32
    %c0_i32_0 = arith.constant 0 : i32
    %c0_i32_1 = arith.constant 0 : i32
    return %c0_i32, %c0_i32_0 : i32, i32
  }
  func.func @transform_12(%arg0: i32) -> (i32, i32) {
    %c0_i32 = arith.constant 0 : i32
    %c0_i32_0 = arith.constant 0 : i32
    return %arg0, %c0_i32 : i32, i32
  }
}

</mosaic_0001>

<llo_original>
// kernel: tpu_custom_call.1
$region0: #{tpu_custom_call.1}
  #allocation0 [shape = 'u32[]', space=smem, size = 0x4, offset = 0x4, fixed_abs, tag = 'smem constant byte address 0x4 - core index']
  #allocation1 [shape = 'u32[144,128]{1,0:T(1,128)}', space=vmem, size = 0x12000, scoped, tag = 'internal scratch']
  #allocation2 [shape = 's32[1]{0:T(128)S(6)}', space=smem, size = 0x200, scoped, tag = 'scoped memory for tpu_custom_call.1']
  %s0 = inlined_call_operand.<no memory space> [shape: s32[1], index: 0, kind: input, shape index: {}]
  %s1 = inlined_call_operand.hbm [shape: f32[16,96], index: 1, kind: input, shape index: {}]
  %s2 = inlined_call_operand.hbm [shape: bf16[96,512], index: 2, kind: input, shape index: {}]
  %s3 = inlined_call_operand.vmem [shape: f32[1,512], index: 3, kind: input, shape index: {}]
  %s4 = inlined_call_operand.hbm [shape: bf16[512,256], index: 4, kind: input, shape index: {}]
  %s5 = inlined_call_operand.vmem [shape: f32[1,256], index: 5, kind: input, shape index: {}]
  %s6 = inlined_call_operand.hbm [shape: bf16[256,128], index: 6, kind: input, shape index: {}]
  %s7 = inlined_call_operand.vmem [shape: f32[1,128], index: 7, kind: input, shape index: {}]
  %s8 = inlined_call_operand.hbm [shape: bf16[128,128], index: 8, kind: input, shape index: {}]
  %s9 = inlined_call_operand.vmem [shape: f32[1,128], index: 9, kind: input, shape index: {}]
  %s10 = inlined_call_operand.hbm [shape: bf16[128,128], index: 10, kind: input, shape index: {}]
  %s11 = inlined_call_operand.vmem [shape: f32[1,128], index: 11, kind: input, shape index: {}]
  %s12 = inlined_call_operand.hbm [shape: bf16[16,128], index: 12, kind: output, shape index: {}]
  %s13 = sld [smem:[#allocation0]]
  $region82: #{tpu_custom_call.1} parent=0
    _
  %s15 = ssub.s32 1, %s13
  %s16 = scalar_select 0, %s15, %s13
  %17 = sst [smem:[#allocation2]] %s0
  $region1: #{tpu_custom_call.1} parent=0
    #allocation3 [shape = 'u8[8192]{0}', space=vmem, size = 0x2000, scoped, tag = 'input window, operand 1, single buffered']
    #allocation4 [shape = 's32[1]{0}', space=sflag, size = 0x4, scoped, tag = 'scoped memory for tpu_custom_call.1']
    #allocation5 [shape = 's32[1]{0}', space=sflag, size = 0x4, scoped, tag = 'scoped memory for tpu_custom_call.1']
    #allocation6 [shape = 'u8[98304]{0}', space=vmem, size = 0x18000, scoped, tag = 'input window, operand 2, single buffered']
    #allocation7 [shape = 's32[1]{0}', space=sflag, size = 0x4, scoped, tag = 'scoped memory for tpu_custom_call.1']
    #allocation8 [shape = 'u8[262144]{0}', space=vmem, size = 0x40000, scoped, tag = 'input window, operand 4, single buffered']
    #allocation9 [shape = 'u8[65536]{0}', space=vmem, size = 0x10000, scoped, tag = 'input window, operand 6, single buffered']
    #allocation10 [shape = 's32[1]{0}', space=sflag, size = 0x4, scoped, tag = 'scoped memory for tpu_custom_call.1']
    #allocation11 [shape = 'u8[32768]{0}', space=vmem, size = 0x8000, scoped, tag = 'input window, operand 8, single buffered']
    #allocation12 [shape = 'u8[32768]{0}', space=vmem, size = 0x8000, scoped, tag = 'input window, operand 10, single buffered']
    #allocation13 [shape = 's32[1]{0}', space=sflag, size = 0x4, scoped, tag = 'scoped memory for tpu_custom_call.1']
    #allocation14 [shape = 'u8[4096]{0}', space=vmem, size = 0x1000, scoped, tag = 'output window, operand 0, single buffered']
    %18 = vsyncpa [#allocation4], 0
    %19 = vsyncpa [#allocation7], 0
    %20 = vsyncpa [#allocation10], 0
    %21 = vsyncpa [#allocation13], 0
    %22 = vsyncpa [#allocation5], 0
    // Predicated region
    $region2: #{tpu_custom_call.1} parent=1 // pred_check
      _
    $region3: #{tpu_custom_call.1} parent=1 // pred_check_branch
      %24 = sbr.rel (0) target = $region5
    $region4: #{tpu_custom_call.1} parent=1 // pred_region
      _
    $region5: #{tpu_custom_call.1} parent=1 // pred_fallthru
      _
    // Predicated region
    $region6: #{tpu_custom_call.1} parent=1 // pred_check
      _
    $region7: #{tpu_custom_call.1} parent=1 // pred_check_branch
      %26 = sbr.rel (0) target = $region9
    $region8: #{tpu_custom_call.1} parent=1 // pred_region
      %s28 = ssub.s32 256, 256
      %29 = vsyncadd [#allocation4], %s28
      %s30 = sshll.u32 [#allocation3], 4
      %s31 = int_to_ptr.vmem [resolvable:$true] %s30
      %36 = dma.hbm_to_vmem [thread:$0]  %s1, 256, %s31, [#allocation4], 128, 128, 8
    $region9: #{tpu_custom_call.1} parent=1 // pred_fallthru
      _
    // Predicated region
    $region10: #{tpu_custom_call.1} parent=1 // pred_check
      _
    $region11: #{tpu_custom_call.1} parent=1 // pred_check_branch
      %38 = sbr.rel (0) target = $region13
    $region12: #{tpu_custom_call.1} parent=1 // pred_region
      %s40 = ssub.s32 3072, 3072
      %41 = vsyncadd [#allocation7], %s40
      %s42 = sshll.u32 [#allocation6], 4
      %s43 = int_to_ptr.vmem [resolvable:$true] %s42
      %48 = dma.hbm_to_vmem [thread:$0]  %s2, 3072, %s43, [#allocation7], 256, 256, 16
    $region13: #{tpu_custom_call.1} parent=1 // pred_fallthru
      _
    // Predicated region
    $region14: #{tpu_custom_call.1} parent=1 // pred_check
      _
    $region15: #{tpu_custom_call.1} parent=1 // pred_check_branch
      %50 = sbr.rel (0) target = $region17
    $region16: #{tpu_custom_call.1} parent=1 // pred_region
      _
    $region17: #{tpu_custom_call.1} parent=1 // pred_fallthru
      _
    // Predicated region
    $region18: #{tpu_custom_call.1} parent=1 // pred_check
      _
    $region19: #{tpu_custom_call.1} parent=1 // pred_check_branch
      %52 = sbr.rel (0) target = $region21
    $region20: #{tpu_custom_call.1} parent=1 // pred_region
      %s54 = ssub.s32 8192, 8192
      %55 = vsyncadd [#allocation7], %s54
      %s56 = sshll.u32 [#allocation8], 4
      %s57 = int_to_ptr.vmem [resolvable:$true] %s56
      %62 = dma.hbm_to_vmem [thread:$0]  %s4, 8192, %s57, [#allocation7], 128, 128, 8
    $region21: #{tpu_custom_call.1} parent=1 // pred_fallthru
      _
    // Predicated region
    $region22: #{tpu_custom_call.1} parent=1 // pred_check
      _
    $region23: #{tpu_custom_call.1} parent=1 // pred_check_branch
      %64 = sbr.rel (0) target = $region25
    $region24: #{tpu_custom_call.1} parent=1 // pred_region
      _
    $region25: #{tpu_custom_call.1} parent=1 // pred_fallthru
      _
    // Predicated region
    $region26: #{tpu_custom_call.1} parent=1 // pred_check
      _
    $region27: #{tpu_custom_call.1} parent=1 // pred_check_branch
      %66 = sbr.rel (0) target = $region29
    $region28: #{tpu_custom_call.1} parent=1 // pred_region
      %s68 = ssub.s32 2048, 2048
      %69 = vsyncadd [#allocation10], %s68
      %s70 = sshll.u32 [#allocation9], 4
      %s71 = int_to_ptr.vmem [resolvable:$true] %s70
      %76 = dma.hbm_to_vmem [thread:$0]  %s6, 2048, %s71, [#allocation10], 64, 64, 4
    $region29: #{tpu_custom_call.1} parent=1 // pred_fallthru
      _
    // Predicated region
    $region30: #{tpu_custom_call.1} parent=1 // pred_check
      _
    $region31: #{tpu_custom_call.1} parent=1 // pred_check_branch
      %78 = sbr.rel (0) target = $region33
    $region32: #{tpu_custom_call.1} parent=1 // pred_region
      _
    $region33: #{tpu_custom_call.1} parent=1 // pred_fallthru
      _
    // Predicated region
    $region34: #{tpu_custom_call.1} parent=1 // pred_check
      _
    $region35: #{tpu_custom_call.1} parent=1 // pred_check_branch
      %80 = sbr.rel (0) target = $region37
    $region36: #{tpu_custom_call.1} parent=1 // pred_region
      %s82 = ssub.s32 1024, 1024
      %83 = vsyncadd [#allocation10], %s82
      %s84 = sshll.u32 [#allocation11], 4
      %s85 = int_to_ptr.vmem [resolvable:$true] %s84
      %90 = dma.hbm_to_vmem [thread:$0]  %s8, 1024, %s85, [#allocation10], 64, 64, 4
    $region37: #{tpu_custom_call.1} parent=1 // pred_fallthru
      _
    // Predicated region
    $region38: #{tpu_custom_call.1} parent=1 // pred_check
      _
    $region39: #{tpu_custom_call.1} parent=1 // pred_check_branch
      %92 = sbr.rel (0) target = $region41
    $region40: #{tpu_custom_call.1} parent=1 // pred_region
      _
    $region41: #{tpu_custom_call.1} parent=1 // pred_fallthru
      _
    // Predicated region
    $region42: #{tpu_custom_call.1} parent=1 // pred_check
      _
    $region43: #{tpu_custom_call.1} parent=1 // pred_check_branch
      %94 = sbr.rel (0) target = $region45
    $region44: #{tpu_custom_call.1} parent=1 // pred_region
      %s96 = ssub.s32 1024, 1024
      %97 = vsyncadd [#allocation13], %s96
      %s98 = sshll.u32 [#allocation12], 4
      %s99 = int_to_ptr.vmem [resolvable:$true] %s98
      %104 = dma.hbm_to_vmem [thread:$0]  %s10, 1024, %s99, [#allocation13], 64, 64, 4
    $region45: #{tpu_custom_call.1} parent=1 // pred_fallthru
      _
    // Predicated region
    $region46: #{tpu_custom_call.1} parent=1 // pred_check
      _
    $region47: #{tpu_custom_call.1} parent=1 // pred_check_branch
      %106 = sbr.rel (0) target = $region49
    $region48: #{tpu_custom_call.1} parent=1 // pred_region
      _
    $region49: #{tpu_custom_call.1} parent=1 // pred_fallthru
      _
    // Predicated region
    $region50: #{tpu_custom_call.1} parent=1 // pred_check
      _
    $region51: #{tpu_custom_call.1} parent=1 // pred_check_branch
      %108 = sbr.rel (0) target = $region53
    $region52: #{tpu_custom_call.1} parent=1 // pred_region
      %109 = dma.done [#allocation4], 256
    $region53: #{tpu_custom_call.1} parent=1 // pred_fallthru
      _
    // Predicated region
    $region54: #{tpu_custom_call.1} parent=1 // pred_check
      _
    $region55: #{tpu_custom_call.1} parent=1 // pred_check_branch
      %111 = sbr.rel (0) target = $region57
    $region56: #{tpu_custom_call.1} parent=1 // pred_region
      %112 = dma.done [#allocation7], 3072
    $region57: #{tpu_custom_call.1} parent=1 // pred_fallthru
      _
    // Predicated region
    $region58: #{tpu_custom_call.1} parent=1 // pred_check
      _
    $region59: #{tpu_custom_call.1} parent=1 // pred_check_branch
      %114 = sbr.rel (0) target = $region61
    $region60: #{tpu_custom_call.1} parent=1 // pred_region
      %115 = dma.done [#allocation7], 8192
    $region61: #{tpu_custom_call.1} parent=1 // pred_fallthru
      _
    // Predicated region
    $region62: #{tpu_custom_call.1} parent=1 // pred_check
      _
    $region63: #{tpu_custom_call.1} parent=1 // pred_check_branch
      %117 = sbr.rel (0) target = $region65
    $region64: #{tpu_custom_call.1} parent=1 // pred_region
      %118 = dma.done [#allocation10], 2048
    $region65: #{tpu_custom_call.1} parent=1 // pred_fallthru
      _
    // Predicated region
    $region66: #{tpu_custom_call.1} parent=1 // pred_check
      _
    $region67: #{tpu_custom_call.1} parent=1 // pred_check_branch
      %120 = sbr.rel (0) target = $region69
    $region68: #{tpu_custom_call.1} parent=1 // pred_region
      %121 = dma.done [#allocation10], 1024
    $region69: #{tpu_custom_call.1} parent=1 // pred_fallthru
      _
    // Predicated region
    $region70: #{tpu_custom_call.1} parent=1 // pred_check
      _
    $region71: #{tpu_custom_call.1} parent=1 // pred_check_branch
      %123 = sbr.rel (0) target = $region73
    $region72: #{tpu_custom_call.1} parent=1 // pred_region
      %124 = dma.done [#allocation13], 1024
    $region73: #{tpu_custom_call.1} parent=1 // pred_fallthru
      _
    %v126 = vld [vmem:[#allocation3] sm:$0xff]
    %v127 = vld [vmem:[#allocation3 + $0x8] sm:$0xff]
    %v128 = vpack.c.bf16 %v127, %v126
    %v129 = vld [vmem:[#allocation6] sm:$0xff]
    %v130 = vld [vmem:[#allocation6 + $0x8] sm:$0xff]
    %v131 = vld [vmem:[#allocation6 + $0x10] sm:$0xff]
    %v132 = vld [vmem:[#allocation6 + $0x18] sm:$0xff]
    %v133 = vld [vmem:[#allocation6 + $0x20] sm:$0xff]
    %v134 = vld [vmem:[#allocation6 + $0x28] sm:$0xff]
    %v135 = vld [vmem:[#allocation6 + $0x30] sm:$0xff]
    %v136 = vld [vmem:[#allocation6 + $0x38] sm:$0xff]
    %v137 = vld [vmem:[#allocation6 + $0x40] sm:$0xff]
    %v138 = vld [vmem:[#allocation6 + $0x48] sm:$0xff]
    %v139 = vld [vmem:[#allocation6 + $0x50] sm:$0xff]
    %v140 = vld [vmem:[#allocation6 + $0x58] sm:$0xff]
    %v141 = vld [vmem:[#allocation6 + $0x60] sm:$0xff]
    %v142 = vld [vmem:[#allocation6 + $0x68] sm:$0xff]
    %v143 = vld [vmem:[#allocation6 + $0x70] sm:$0xff]
    %v144 = vld [vmem:[#allocation6 + $0x78] sm:$0xff]
    %v145 = vld [vmem:[#allocation6 + $0x80] sm:$0xff]
    %v146 = vld [vmem:[#allocation6 + $0x88] sm:$0xff]
    %v147 = vld [vmem:[#allocation6 + $0x90] sm:$0xff]
    %v148 = vld [vmem:[#allocation6 + $0x98] sm:$0xff]
    %v149 = vld [vmem:[#allocation6 + $0xa0] sm:$0xff]
    %v150 = vld [vmem:[#allocation6 + $0xa8] sm:$0xff]
    %v151 = vld [vmem:[#allocation6 + $0xb0] sm:$0xff]
    %v152 = vld [vmem:[#allocation6 + $0xb8] sm:$0xff]
    %v153 = vld [vmem:[%s3] sm:$0xf]
    %v155 = vlaneseq
    %v156 = vshrl.u32 %v155, 7
    %v157 = vsub.s32 0, %v156
    %v158 = vrot.slane %v153, %v157
    %v159 = vlaneseq
    %v160 = vshrl.u32 %v159, 7
    %v161 = vsub.s32 1, %v160
    %v162 = vrot.slane %v153, %v161
    %v163 = vlaneseq
    %v164 = vshrl.u32 %v163, 7
    %v165 = vsub.s32 2, %v164
    %v166 = vrot.slane %v153, %v165
    %v167 = vlaneseq
    %v168 = vshrl.u32 %v167, 7
    %v169 = vsub.s32 3, %v168
    %v170 = vrot.slane %v153, %v169
    %v199 = vunpack.c.l.b16 %v129
    %v200 = vunpack.c.h.b16 %v129
    %v201 = vunpack.c.l.b16 %v130
    %v202 = vunpack.c.h.b16 %v130
    %v203 = vunpack.c.l.b16 %v131
    %v204 = vunpack.c.h.b16 %v131
    %v205 = vunpack.c.l.b16 %v132
    %v206 = vunpack.c.h.b16 %v132
    %v207 = vunpack.c.l.b16 %v133
    %v208 = vunpack.c.h.b16 %v133
    %v209 = vunpack.c.l.b16 %v134
    %v210 = vunpack.c.h.b16 %v134
    %v211 = vunpack.c.l.b16 %v135
    %v212 = vunpack.c.h.b16 %v135
    %v213 = vunpack.c.l.b16 %v136
    %v214 = vunpack.c.h.b16 %v136
    %v215 = vunpack.c.l.b16 %v137
    %v216 = vunpack.c.h.b16 %v137
    %v217 = vunpack.c.l.b16 %v138
    %v218 = vunpack.c.h.b16 %v138
    %v219 = vunpack.c.l.b16 %v139
    %v220 = vunpack.c.h.b16 %v139
    %v221 = vunpack.c.l.b16 %v140
    %v222 = vunpack.c.h.b16 %v140
    %v223 = vunpack.c.l.b16 %v141
    %v224 = vunpack.c.h.b16 %v141
    %v225 = vunpack.c.l.b16 %v142
    %v226 = vunpack.c.h.b16 %v142
    %v227 = vunpack.c.l.b16 %v143
    %v228 = vunpack.c.h.b16 %v143
    %v229 = vunpack.c.l.b16 %v144
    %v230 = vunpack.c.h.b16 %v144
    %v231 = vunpack.c.l.b16 %v145
    %v232 = vunpack.c.h.b16 %v145
    %v233 = vunpack.c.l.b16 %v146
    %v234 = vunpack.c.h.b16 %v146
    %v235 = vunpack.c.l.b16 %v147
    %v236 = vunpack.c.h.b16 %v147
    %v237 = vunpack.c.l.b16 %v148
    %v238 = vunpack.c.h.b16 %v148
    %v239 = vunpack.c.l.b16 %v149
    %v240 = vunpack.c.h.b16 %v149
    %v241 = vunpack.c.l.b16 %v150
    %v242 = vunpack.c.h.b16 %v150
    %v243 = vunpack.c.l.b16 %v151
    %v244 = vunpack.c.h.b16 %v151
    %v245 = vunpack.c.l.b16 %v152
    %v246 = vunpack.c.h.b16 %v152
    %v247 = vpack.c.b16 %v203, %v199
    %v248 = vpack.c.b16 %v204, %v200
    %v249 = vpack.c.b16 %v205, %v201
    %v250 = vpack.c.b16 %v206, %v202
    %v251 = vpack.c.b16 %v211, %v207
    %v252 = vpack.c.b16 %v212, %v208
    %v253 = vpack.c.b16 %v213, %v209
    %v254 = vpack.c.b16 %v214, %v210
    %v255 = vpack.c.b16 %v219, %v215
    %v256 = vpack.c.b16 %v220, %v216
    %v257 = vpack.c.b16 %v221, %v217
    %v258 = vpack.c.b16 %v222, %v218
    %v259 = vpack.c.b16 %v227, %v223
    %v260 = vpack.c.b16 %v228, %v224
    %v261 = vpack.c.b16 %v229, %v225
    %v262 = vpack.c.b16 %v230, %v226
    %v263 = vpack.c.b16 %v235, %v231
    %v264 = vpack.c.b16 %v236, %v232
    %v265 = vpack.c.b16 %v237, %v233
    %v266 = vpack.c.b16 %v238, %v234
    %v267 = vpack.c.b16 %v243, %v239
    %v268 = vpack.c.b16 %v244, %v240
    %v269 = vpack.c.b16 %v245, %v241
    %v270 = vpack.c.b16 %v246, %v242
    %vm295 = vcmask 785408
    %v297 = vsel %vm295, %v128, 0
    %299 = vmatprep.subr.bf16.mxu0 0
    %300 = vmatpush1.bf16.msra.mxu0 0
    %301 = vmatprep.subr.bf16.mxu0 0
    %302 = vmatpush1.bf16.msra.mxu0 0
    %303 = vmatprep.subr.bf16.mxu0 %v268
    %304 = vmatpush1.bf16.msra.mxu0 %v267
    %305 = vmatprep.subr.bf16.mxu0 %v264
    %306 = vmatpush1.bf16.msra.mxu0 %v263
    %307 = vmatprep.subr.bf16.mxu0 %v260
    %308 = vmatpush1.bf16.msra.mxu0 %v259
    %309 = vmatprep.subr.bf16.mxu0 %v256
    %310 = vmatpush1.bf16.msra.mxu0 %v255
    %311 = vmatprep.subr.bf16.mxu0 %v252
    %312 = vmatpush1.bf16.msra.mxu0 %v251
    %313 = vmatprep.subr.bf16.mxu0 %v248
    %314 = vmatpush1.bf16.msra.mxu0 %v247
    %315 = vmatprep.subr.bf16.mxu0 0
    %316 = vmatpush2.bf16.msra.mxu0 0
    %317 = vmatprep.subr.bf16.mxu0 0
    %318 = vmatpush2.bf16.msra.mxu0 0
    %319 = vmatprep.subr.bf16.mxu0 0
    %320 = vmatpush2.bf16.msra.mxu0 0
    %321 = vmatprep.subr.bf16.mxu0 0
    %322 = vmatpush2.bf16.msra.mxu0 0
    %323 = vmatprep.subr.bf16.mxu0 0
    %324 = vmatpush2.bf16.msra.mxu0 0
    %325 = vmatprep.subr.bf16.mxu0 0
    %326 = vmatpush2.bf16.msra.mxu0 0
    %327 = vmatprep.subr.bf16.mxu0 0
    %328 = vmatpush2.bf16.msra.mxu0 0
    %329 = vmatprep.subr.bf16.mxu0 0
    %330 = vmatpush2.bf16.msra.mxu0 0
    %331 = vmatprep.mubr.bf16.mxu0 0
    %332 = vmatmul.mubr.bf16.gmra.mxu0 %v297
    %v333 = vpop.f32.mrf.mxu0
    %v334 = vadd.f32 %v158, %v333
    %v335 = vpop.f32.mrf.mxu0
    %v336 = vadd.f32 %v162, %v335
    %v337 = vpop.f32.mrf.mxu0
    %v338 = vadd.f32 %v158, %v337
    %v339 = vpop.f32.mrf.mxu0
    %v340 = vadd.f32 %v162, %v339
    %341 = vdwg.mxu0
    %342 = vmatprep.subr.bf16.mxu0 0
    %343 = vmatpush1.bf16.msra.mxu0 0
    %344 = vmatprep.subr.bf16.mxu0 0
    %345 = vmatpush1.bf16.msra.mxu0 0
    %346 = vmatprep.subr.bf16.mxu0 %v270
    %347 = vmatpush1.bf16.msra.mxu0 %v269
    %348 = vmatprep.subr.bf16.mxu0 %v266
    %349 = vmatpush1.bf16.msra.mxu0 %v265
    %350 = vmatprep.subr.bf16.mxu0 %v262
    %351 = vmatpush1.bf16.msra.mxu0 %v261
    %352 = vmatprep.subr.bf16.mxu0 %v258
    %353 = vmatpush1.bf16.msra.mxu0 %v257
    %354 = vmatprep.subr.bf16.mxu0 %v254
    %355 = vmatpush1.bf16.msra.mxu0 %v253
    %356 = vmatprep.subr.bf16.mxu0 %v250
    %357 = vmatpush1.bf16.msra.mxu0 %v249
    %358 = vmatprep.subr.bf16.mxu0 0
    %359 = vmatpush2.bf16.msra.mxu0 0
    %360 = vmatprep.subr.bf16.mxu0 0
    %361 = vmatpush2.bf16.msra.mxu0 0
    %362 = vmatprep.subr.bf16.mxu0 0
    %363 = vmatpush2.bf16.msra.mxu0 0
    %364 = vmatprep.subr.bf16.mxu0 0
    %365 = vmatpush2.bf16.msra.mxu0 0
    %366 = vmatprep.subr.bf16.mxu0 0
    %367 = vmatpush2.bf16.msra.mxu0 0
    %368 = vmatprep.subr.bf16.mxu0 0
    %369 = vmatpush2.bf16.msra.mxu0 0
    %370 = vmatprep.subr.bf16.mxu0 0
    %371 = vmatpush2.bf16.msra.mxu0 0
    %372 = vmatprep.subr.bf16.mxu0 0
    %373 = vmatpush2.bf16.msra.mxu0 0
    %374 = vmatprep.mubr.bf16.mxu0 0
    %375 = vmatmul.mubr.bf16.gmra.mxu0 %v297
    %v376 = vpop.f32.mrf.mxu0
    %v377 = vadd.f32 %v166, %v376
    %v378 = vpop.f32.mrf.mxu0
    %v379 = vadd.f32 %v170, %v378
    %v380 = vpop.f32.mrf.mxu0
    %v381 = vadd.f32 %v166, %v380
    %v382 = vpop.f32.mrf.mxu0
    %v383 = vadd.f32 %v170, %v382
    %384 = vdwg.mxu0
    %v385 = vpack.c.bf16 %v338, %v334
    %v386 = vpack.c.bf16 %v340, %v336
    %v387 = vpack.c.bf16 %v381, %v377
    %v388 = vpack.c.bf16 %v383, %v379
    %v389 = vmax.bf16 %v385, 0
    %v390 = vmax.bf16 %v386, 0
    %v391 = vmax.bf16 %v387, 0
    %v392 = vmax.bf16 %v388, 0
    %v393 = vld [vmem:[#allocation8] sm:$0xff]
    %v394 = vld [vmem:[#allocation8 + $0x8] sm:$0xff]
    %v395 = vld [vmem:[#allocation8 + $0x10] sm:$0xff]
    %v396 = vld [vmem:[#allocation8 + $0x18] sm:$0xff]
    %v397 = vld [vmem:[#allocation8 + $0x20] sm:$0xff]
    %v398 = vld [vmem:[#allocation8 + $0x28] sm:$0xff]
    %v399 = vld [vmem:[#allocation8 + $0x30] sm:$0xff]
    %v400 = vld [vmem:[#allocation8 + $0x38] sm:$0xff]
    %v401 = vld [vmem:[#allocation8 + $0x40] sm:$0xff]
    %v402 = vld [vmem:[#allocation8 + $0x48] sm:$0xff]
    %v403 = vld [vmem:[#allocation8 + $0x50] sm:$0xff]
    %v404 = vld [vmem:[#allocation8 + $0x58] sm:$0xff]
    %v405 = vld [vmem:[#allocation8 + $0x60] sm:$0xff]
    %v406 = vld [vmem:[#allocation8 + $0x68] sm:$0xff]
    %v407 = vld [vmem:[#allocation8 + $0x70] sm:$0xff]
    %v408 = vld [vmem:[#allocation8 + $0x78] sm:$0xff]
    %v409 = vld [vmem:[#allocation8 + $0x80] sm:$0xff]
    %v410 = vld [vmem:[#allocation8 + $0x88] sm:$0xff]
    %v411 = vld [vmem:[#allocation8 + $0x90] sm:$0xff]
    %v412 = vld [vmem:[#allocation8 + $0x98] sm:$0xff]
    %v413 = vld [vmem:[#allocation8 + $0xa0] sm:$0xff]
    %v414 = vld [vmem:[#allocation8 + $0xa8] sm:$0xff]
    %v415 = vld [vmem:[#allocation8 + $0xb0] sm:$0xff]
    %v416 = vld [vmem:[#allocation8 + $0xb8] sm:$0xff]
    %v417 = vld [vmem:[#allocation8 + $0xc0] sm:$0xff]
    %v418 = vld [vmem:[#allocation8 + $0xc8] sm:$0xff]
    %v419 = vld [vmem:[#allocation8 + $0xd0] sm:$0xff]
    %v420 = vld [vmem:[#allocation8 + $0xd8] sm:$0xff]
    %v421 = vld [vmem:[#allocation8 + $0xe0] sm:$0xff]
    %v422 = vld [vmem:[#allocation8 + $0xe8] sm:$0xff]
    %v423 = vld [vmem:[#allocation8 + $0xf0] sm:$0xff]
    %v424 = vld [vmem:[#allocation8 + $0xf8] sm:$0xff]
    %v425 = vld [vmem:[#allocation8 + $0x100] sm:$0xff]
    %v426 = vld [vmem:[#allocation8 + $0x108] sm:$0xff]
    %v427 = vld [vmem:[#allocation8 + $0x110] sm:$0xff]
    %v428 = vld [vmem:[#allocation8 + $0x118] sm:$0xff]
    %v429 = vld [vmem:[#allocation8 + $0x120] sm:$0xff]
    %v430 = vld [vmem:[#allocation8 + $0x128] sm:$0xff]
    %v431 = vld [vmem:[#allocation8 + $0x130] sm:$0xff]
    %v432 = vld [vmem:[#allocation8 + $0x138] sm:$0xff]
    %v433 = vld [vmem:[#allocation8 + $0x140] sm:$0xff]
    %v434 = vld [vmem:[#allocation8 + $0x148] sm:$0xff]
    %v435 = vld [vmem:[#allocation8 + $0x150] sm:$0xff]
    %v436 = vld [vmem:[#allocation8 + $0x158] sm:$0xff]
    %v437 = vld [vmem:[#allocation8 + $0x160] sm:$0xff]
    %v438 = vld [vmem:[#allocation8 + $0x168] sm:$0xff]
    %v439 = vld [vmem:[#allocation8 + $0x170] sm:$0xff]
    %v440 = vld [vmem:[#allocation8 + $0x178] sm:$0xff]
    %v441 = vld [vmem:[#allocation8 + $0x180] sm:$0xff]
    %v442 = vld [vmem:[#allocation8 + $0x188] sm:$0xff]
    %v443 = vld [vmem:[#allocation8 + $0x190] sm:$0xff]
    %v444 = vld [vmem:[#allocation8 + $0x198] sm:$0xff]
    %v445 = vld [vmem:[#allocation8 + $0x1a0] sm:$0xff]
    %v446 = vld [vmem:[#allocation8 + $0x1a8] sm:$0xff]
    %v447 = vld [vmem:[#allocation8 + $0x1b0] sm:$0xff]
    %v448 = vld [vmem:[#allocation8 + $0x1b8] sm:$0xff]
    %v449 = vld [vmem:[#allocation8 + $0x1c0] sm:$0xff]
    %v450 = vld [vmem:[#allocation8 + $0x1c8] sm:$0xff]
    %v451 = vld [vmem:[#allocation8 + $0x1d0] sm:$0xff]
    %v452 = vld [vmem:[#allocation8 + $0x1d8] sm:$0xff]
    %v453 = vld [vmem:[#allocation8 + $0x1e0] sm:$0xff]
    %v454 = vld [vmem:[#allocation8 + $0x1e8] sm:$0xff]
    %v455 = vld [vmem:[#allocation8 + $0x1f0] sm:$0xff]
    %v456 = vld [vmem:[#allocation8 + $0x1f8] sm:$0xff]
    %v457 = vld [vmem:[%s5] sm:$0x3]
    %v459 = vlaneseq
    %v460 = vshrl.u32 %v459, 7
    %v461 = vsub.s32 0, %v460
    %v462 = vrot.slane %v457, %v461
    %v463 = vlaneseq
    %v464 = vshrl.u32 %v463, 7
    %v465 = vsub.s32 1, %v464
    %v466 = vrot.slane %v457, %v465
    %v533 = vunpack.c.l.b16 %v393
    %v534 = vunpack.c.h.b16 %v393
    %v535 = vunpack.c.l.b16 %v394
    %v536 = vunpack.c.h.b16 %v394
    %v537 = vunpack.c.l.b16 %v395
    %v538 = vunpack.c.h.b16 %v395
    %v539 = vunpack.c.l.b16 %v396
    %v540 = vunpack.c.h.b16 %v396
    %v541 = vunpack.c.l.b16 %v397
    %v542 = vunpack.c.h.b16 %v397
    %v543 = vunpack.c.l.b16 %v398
    %v544 = vunpack.c.h.b16 %v398
    %v545 = vunpack.c.l.b16 %v399
    %v546 = vunpack.c.h.b16 %v399
    %v547 = vunpack.c.l.b16 %v400
    %v548 = vunpack.c.h.b16 %v400
    %v549 = vunpack.c.l.b16 %v401
    %v550 = vunpack.c.h.b16 %v401
    %v551 = vunpack.c.l.b16 %v402
    %v552 = vunpack.c.h.b16 %v402
    %v553 = vunpack.c.l.b16 %v403
    %v554 = vunpack.c.h.b16 %v403
    %v555 = vunpack.c.l.b16 %v404
    %v556 = vunpack.c.h.b16 %v404
    %v557 = vunpack.c.l.b16 %v405
    %v558 = vunpack.c.h.b16 %v405
    %v559 = vunpack.c.l.b16 %v406
    %v560 = vunpack.c.h.b16 %v406
    %v561 = vunpack.c.l.b16 %v407
    %v562 = vunpack.c.h.b16 %v407
    %v563 = vunpack.c.l.b16 %v408
    %v564 = vunpack.c.h.b16 %v408
    %v565 = vunpack.c.l.b16 %v409
    %v566 = vunpack.c.h.b16 %v409
    %v567 = vunpack.c.l.b16 %v410
    %v568 = vunpack.c.h.b16 %v410
    %v569 = vunpack.c.l.b16 %v411
    %v570 = vunpack.c.h.b16 %v411
    %v571 = vunpack.c.l.b16 %v412
    %v572 = vunpack.c.h.b16 %v412
    %v573 = vunpack.c.l.b16 %v413
    %v574 = vunpack.c.h.b16 %v413
    %v575 = vunpack.c.l.b16 %v414
    %v576 = vunpack.c.h.b16 %v414
    %v577 = vunpack.c.l.b16 %v415
    %v578 = vunpack.c.h.b16 %v415
    %v579 = vunpack.c.l.b16 %v416
    %v580 = vunpack.c.h.b16 %v416
    %v581 = vunpack.c.l.b16 %v417
    %v582 = vunpack.c.h.b16 %v417
    %v583 = vunpack.c.l.b16 %v418
    %v584 = vunpack.c.h.b16 %v418
    %v585 = vunpack.c.l.b16 %v419
    %v586 = vunpack.c.h.b16 %v419
    %v587 = vunpack.c.l.b16 %v420
    %v588 = vunpack.c.h.b16 %v420
    %v589 = vunpack.c.l.b16 %v421
    %v590 = vunpack.c.h.b16 %v421
    %v591 = vunpack.c.l.b16 %v422
    %v592 = vunpack.c.h.b16 %v422
    %v593 = vunpack.c.l.b16 %v423
    %v594 = vunpack.c.h.b16 %v423
    %v595 = vunpack.c.l.b16 %v424
    %v596 = vunpack.c.h.b16 %v424
    %v597 = vunpack.c.l.b16 %v425
    %v598 = vunpack.c.h.b16 %v425
    %v599 = vunpack.c.l.b16 %v426
    %v600 = vunpack.c.h.b16 %v426
    %v601 = vunpack.c.l.b16 %v427
    %v602 = vunpack.c.h.b16 %v427
    %v603 = vunpack.c.l.b16 %v428
    %v604 = vunpack.c.h.b16 %v428
    %v605 = vunpack.c.l.b16 %v429
    %v606 = vunpack.c.h.b16 %v429
    %v607 = vunpack.c.l.b16 %v430
    %v608 = vunpack.c.h.b16 %v430
    %v609 = vunpack.c.l.b16 %v431
    %v610 = vunpack.c.h.b16 %v431
    %v611 = vunpack.c.l.b16 %v432
    %v612 = vunpack.c.h.b16 %v432
    %v613 = vunpack.c.l.b16 %v433
    %v614 = vunpack.c.h.b16 %v433
    %v615 = vunpack.c.l.b16 %v434
    %v616 = vunpack.c.h.b16 %v434
    %v617 = vunpack.c.l.b16 %v435
    %v618 = vunpack.c.h.b16 %v435
    %v619 = vunpack.c.l.b16 %v436
    %v620 = vunpack.c.h.b16 %v436
    %v621 = vunpack.c.l.b16 %v437
    %v622 = vunpack.c.h.b16 %v437
    %v623 = vunpack.c.l.b16 %v438
    %v624 = vunpack.c.h.b16 %v438
    %v625 = vunpack.c.l.b16 %v439
    %v626 = vunpack.c.h.b16 %v439
    %v627 = vunpack.c.l.b16 %v440
    %v628 = vunpack.c.h.b16 %v440
    %v629 = vunpack.c.l.b16 %v441
    %v630 = vunpack.c.h.b16 %v441
    %v631 = vunpack.c.l.b16 %v442
    %v632 = vunpack.c.h.b16 %v442
    %v633 = vunpack.c.l.b16 %v443
    %v634 = vunpack.c.h.b16 %v443
    %v635 = vunpack.c.l.b16 %v444
    %v636 = vunpack.c.h.b16 %v444
    %v637 = vunpack.c.l.b16 %v445
    %v638 = vunpack.c.h.b16 %v445
    %v639 = vunpack.c.l.b16 %v446
    %v640 = vunpack.c.h.b16 %v446
    %v641 = vunpack.c.l.b16 %v447
    %v642 = vunpack.c.h.b16 %v447
    %v643 = vunpack.c.l.b16 %v448
    %v644 = vunpack.c.h.b16 %v448
    %v645 = vunpack.c.l.b16 %v449
    %v646 = vunpack.c.h.b16 %v449
    %v647 = vunpack.c.l.b16 %v450
    %v648 = vunpack.c.h.b16 %v450
    %v649 = vunpack.c.l.b16 %v451
    %v650 = vunpack.c.h.b16 %v451
    %v651 = vunpack.c.l.b16 %v452
    %v652 = vunpack.c.h.b16 %v452
    %v653 = vunpack.c.l.b16 %v453
    %v654 = vunpack.c.h.b16 %v453
    %v655 = vunpack.c.l.b16 %v454
    %v656 = vunpack.c.h.b16 %v454
    %v657 = vunpack.c.l.b16 %v455
    %v658 = vunpack.c.h.b16 %v455
    %v659 = vunpack.c.l.b16 %v456
    %v660 = vunpack.c.h.b16 %v456
    %v661 = vpack.c.b16 %v535, %v533
    %v662 = vpack.c.b16 %v536, %v534
    %v663 = vpack.c.b16 %v539, %v537
    %v664 = vpack.c.b16 %v540, %v538
    %v665 = vpack.c.b16 %v543, %v541
    %v666 = vpack.c.b16 %v544, %v542
    %v667 = vpack.c.b16 %v547, %v545
    %v668 = vpack.c.b16 %v548, %v546
    %v669 = vpack.c.b16 %v551, %v549
    %v670 = vpack.c.b16 %v552, %v550
    %v671 = vpack.c.b16 %v555, %v553
    %v672 = vpack.c.b16 %v556, %v554
    %v673 = vpack.c.b16 %v559, %v557
    %v674 = vpack.c.b16 %v560, %v558
    %v675 = vpack.c.b16 %v563, %v561
    %v676 = vpack.c.b16 %v564, %v562
    %v677 = vpack.c.b16 %v567, %v565
    %v678 = vpack.c.b16 %v568, %v566
    %v679 = vpack.c.b16 %v571, %v569
    %v680 = vpack.c.b16 %v572, %v570
    %v681 = vpack.c.b16 %v575, %v573
    %v682 = vpack.c.b16 %v576, %v574
    %v683 = vpack.c.b16 %v579, %v577
    %v684 = vpack.c.b16 %v580, %v578
    %v685 = vpack.c.b16 %v583, %v581
    %v686 = vpack.c.b16 %v584, %v582
    %v687 = vpack.c.b16 %v587, %v585
    %v688 = vpack.c.b16 %v588, %v586
    %v689 = vpack.c.b16 %v591, %v589
    %v690 = vpack.c.b16 %v592, %v590
    %v691 = vpack.c.b16 %v595, %v593
    %v692 = vpack.c.b16 %v596, %v594
    %v693 = vpack.c.b16 %v599, %v597
    %v694 = vpack.c.b16 %v600, %v598
    %v695 = vpack.c.b16 %v603, %v601
    %v696 = vpack.c.b16 %v604, %v602
    %v697 = vpack.c.b16 %v607, %v605
    %v698 = vpack.c.b16 %v608, %v606
    %v699 = vpack.c.b16 %v611, %v609
    %v700 = vpack.c.b16 %v612, %v610
    %v701 = vpack.c.b16 %v615, %v613
    %v702 = vpack.c.b16 %v616, %v614
    %v703 = vpack.c.b16 %v619, %v617
    %v704 = vpack.c.b16 %v620, %v618
    %v705 = vpack.c.b16 %v623, %v621
    %v706 = vpack.c.b16 %v624, %v622
    %v707 = vpack.c.b16 %v627, %v625
    %v708 = vpack.c.b16 %v628, %v626
    %v709 = vpack.c.b16 %v631, %v629
    %v710 = vpack.c.b16 %v632, %v630
    %v711 = vpack.c.b16 %v635, %v633
    %v712 = vpack.c.b16 %v636, %v634
    %v713 = vpack.c.b16 %v639, %v637
    %v714 = vpack.c.b16 %v640, %v638
    %v715 = vpack.c.b16 %v643, %v641
    %v716 = vpack.c.b16 %v644, %v642
    %v717 = vpack.c.b16 %v647, %v645
    %v718 = vpack.c.b16 %v648, %v646
    %v719 = vpack.c.b16 %v651, %v649
    %v720 = vpack.c.b16 %v652, %v650
    %v721 = vpack.c.b16 %v655, %v653
    %v722 = vpack.c.b16 %v656, %v654
    %v723 = vpack.c.b16 %v659, %v657
    %v724 = vpack.c.b16 %v660, %v658
    %789 = vmatprep.subr.bf16.mxu0 %v676
    %790 = vmatpush1.bf16.msra.mxu0 %v675
    %791 = vmatprep.subr.bf16.mxu0 %v674
    %792 = vmatpush1.bf16.msra.mxu0 %v673
    %793 = vmatprep.subr.bf16.mxu0 %v672
    %794 = vmatpush1.bf16.msra.mxu0 %v671
    %795 = vmatprep.subr.bf16.mxu0 %v670
    %796 = vmatpush1.bf16.msra.mxu0 %v669
    %797 = vmatprep.subr.bf16.mxu0 %v668
    %798 = vmatpush1.bf16.msra.mxu0 %v667
    %799 = vmatprep.subr.bf16.mxu0 %v666
    %800 = vmatpush1.bf16.msra.mxu0 %v665
    %801 = vmatprep.subr.bf16.mxu0 %v664
    %802 = vmatpush1.bf16.msra.mxu0 %v663
    %803 = vmatprep.subr.bf16.mxu0 %v662
    %804 = vmatpush1.bf16.msra.mxu0 %v661
    %805 = vmatprep.subr.bf16.mxu0 %v692
    %806 = vmatpush2.bf16.msra.mxu0 %v691
    %807 = vmatprep.subr.bf16.mxu0 %v690
    %808 = vmatpush2.bf16.msra.mxu0 %v689
    %809 = vmatprep.subr.bf16.mxu0 %v688
    %810 = vmatpush2.bf16.msra.mxu0 %v687
    %811 = vmatprep.subr.bf16.mxu0 %v686
    %812 = vmatpush2.bf16.msra.mxu0 %v685
    %813 = vmatprep.subr.bf16.mxu0 %v684
    %814 = vmatpush2.bf16.msra.mxu0 %v683
    %815 = vmatprep.subr.bf16.mxu0 %v682
    %816 = vmatpush2.bf16.msra.mxu0 %v681
    %817 = vmatprep.subr.bf16.mxu0 %v680
    %818 = vmatpush2.bf16.msra.mxu0 %v679
    %819 = vmatprep.subr.bf16.mxu0 %v678
    %820 = vmatpush2.bf16.msra.mxu0 %v677
    %821 = vmatprep.mubr.bf16.mxu0 %v390
    %822 = vmatmul.mubr.bf16.gmra.mxu0 %v389
    %v823 = vpop.f32.mrf.mxu0
    %v824 = vadd.f32 %v462, %v823
    %v825 = vpop.f32.mrf.mxu0
    %v826 = vadd.f32 %v466, %v825
    %v827 = vpop.f32.mrf.mxu0
    %v828 = vadd.f32 %v462, %v827
    %v829 = vpop.f32.mrf.mxu0
    %v830 = vadd.f32 %v466, %v829
    %831 = vdwg.mxu0
    %832 = vmatprep.subr.bf16.mxu0 %v708
    %833 = vmatpush1.bf16.msra.mxu0 %v707
    %834 = vmatprep.subr.bf16.mxu0 %v706
    %835 = vmatpush1.bf16.msra.mxu0 %v705
    %836 = vmatprep.subr.bf16.mxu0 %v704
    %837 = vmatpush1.bf16.msra.mxu0 %v703
    %838 = vmatprep.subr.bf16.mxu0 %v702
    %839 = vmatpush1.bf16.msra.mxu0 %v701
    %840 = vmatprep.subr.bf16.mxu0 %v700
    %841 = vmatpush1.bf16.msra.mxu0 %v699
    %842 = vmatprep.subr.bf16.mxu0 %v698
    %843 = vmatpush1.bf16.msra.mxu0 %v697
    %844 = vmatprep.subr.bf16.mxu0 %v696
    %845 = vmatpush1.bf16.msra.mxu0 %v695
    %846 = vmatprep.subr.bf16.mxu0 %v694
    %847 = vmatpush1.bf16.msra.mxu0 %v693
    %848 = vmatprep.subr.bf16.mxu0 %v724
    %849 = vmatpush2.bf16.msra.mxu0 %v723
    %850 = vmatprep.subr.bf16.mxu0 %v722
    %851 = vmatpush2.bf16.msra.mxu0 %v721
    %852 = vmatprep.subr.bf16.mxu0 %v720
    %853 = vmatpush2.bf16.msra.mxu0 %v719
    %854 = vmatprep.subr.bf16.mxu0 %v718
    %855 = vmatpush2.bf16.msra.mxu0 %v717
    %856 = vmatprep.subr.bf16.mxu0 %v716
    %857 = vmatpush2.bf16.msra.mxu0 %v715
    %858 = vmatprep.subr.bf16.mxu0 %v714
    %859 = vmatpush2.bf16.msra.mxu0 %v713
    %860 = vmatprep.subr.bf16.mxu0 %v712
    %861 = vmatpush2.bf16.msra.mxu0 %v711
    %862 = vmatprep.subr.bf16.mxu0 %v710
    %863 = vmatpush2.bf16.msra.mxu0 %v709
    %864 = vmatprep.mubr.bf16.mxu0 %v392
    %865 = vmatmul.mubr.bf16.gmra.mxu0 %v391
    %v866 = vpop.f32.mrf.mxu0
    %v867 = vadd.f32 %v824, %v866
    %v868 = vpop.f32.mrf.mxu0
    %v869 = vadd.f32 %v826, %v868
    %v870 = vpop.f32.mrf.mxu0
    %v871 = vadd.f32 %v828, %v870
    %v872 = vpop.f32.mrf.mxu0
    %v873 = vadd.f32 %v830, %v872
    %874 = vdwg.mxu0
    %v875 = vpack.c.bf16 %v871, %v867
    %v876 = vpack.c.bf16 %v873, %v869
    %v877 = vmax.bf16 %v875, 0
    %v878 = vmax.bf16 %v876, 0
    %v879 = vld [vmem:[#allocation9] sm:$0xf]
    %v880 = vld [vmem:[#allocation9 + $0x4] sm:$0xf]
    %v881 = vld [vmem:[#allocation9 + $0x8] sm:$0xf]
    %v882 = vld [vmem:[#allocation9 + $0xc] sm:$0xf]
    %v883 = vld [vmem:[#allocation9 + $0x10] sm:$0xf]
    %v884 = vld [vmem:[#allocation9 + $0x14] sm:$0xf]
    %v885 = vld [vmem:[#allocation9 + $0x18] sm:$0xf]
    %v886 = vld [vmem:[#allocation9 + $0x1c] sm:$0xf]
    %v887 = vld [vmem:[#allocation9 + $0x20] sm:$0xf]
    %v888 = vld [vmem:[#allocation9 + $0x24] sm:$0xf]
    %v889 = vld [vmem:[#allocation9 + $0x28] sm:$0xf]
    %v890 = vld [vmem:[#allocation9 + $0x2c] sm:$0xf]
    %v891 = vld [vmem:[#allocation9 + $0x30] sm:$0xf]
    %v892 = vld [vmem:[#allocation9 + $0x34] sm:$0xf]
    %v893 = vld [vmem:[#allocation9 + $0x38] sm:$0xf]
    %v894 = vld [vmem:[#allocation9 + $0x3c] sm:$0xf]
    %v895 = vld [vmem:[#allocation9 + $0x40] sm:$0xf]
    %v896 = vld [vmem:[#allocation9 + $0x44] sm:$0xf]
    %v897 = vld [vmem:[#allocation9 + $0x48] sm:$0xf]
    %v898 = vld [vmem:[#allocation9 + $0x4c] sm:$0xf]
    %v899 = vld [vmem:[#allocation9 + $0x50] sm:$0xf]
    %v900 = vld [vmem:[#allocation9 + $0x54] sm:$0xf]
    %v901 = vld [vmem:[#allocation9 + $0x58] sm:$0xf]
    %v902 = vld [vmem:[#allocation9 + $0x5c] sm:$0xf]
    %v903 = vld [vmem:[#allocation9 + $0x60] sm:$0xf]
    %v904 = vld [vmem:[#allocation9 + $0x64] sm:$0xf]
    %v905 = vld [vmem:[#allocation9 + $0x68] sm:$0xf]
    %v906 = vld [vmem:[#allocation9 + $0x6c] sm:$0xf]
    %v907 = vld [vmem:[#allocation9 + $0x70] sm:$0xf]
    %v908 = vld [vmem:[#allocation9 + $0x74] sm:$0xf]
    %v909 = vld [vmem:[#allocation9 + $0x78] sm:$0xf]
    %v910 = vld [vmem:[#allocation9 + $0x7c] sm:$0xf]
    %v911 = vld [vmem:[%s7] sm:$0x1]
    %v913 = vlaneseq
    %v914 = vshrl.u32 %v913, 7
    %v915 = vsub.s32 0, %v914
    %v916 = vrot.slane %v911, %v915
    %v950 = vunpack.c.l.b16 %v879
    %v951 = vunpack.c.l.b16 %v880
    %v952 = vunpack.c.l.b16 %v881
    %v953 = vunpack.c.l.b16 %v882
    %v954 = vunpack.c.l.b16 %v883
    %v955 = vunpack.c.l.b16 %v884
    %v956 = vunpack.c.l.b16 %v885
    %v957 = vunpack.c.l.b16 %v886
    %v958 = vunpack.c.l.b16 %v887
    %v959 = vunpack.c.l.b16 %v888
    %v960 = vunpack.c.l.b16 %v889
    %v961 = vunpack.c.l.b16 %v890
    %v962 = vunpack.c.l.b16 %v891
    %v963 = vunpack.c.l.b16 %v892
    %v964 = vunpack.c.l.b16 %v893
    %v965 = vunpack.c.l.b16 %v894
    %v966 = vunpack.c.l.b16 %v895
    %v967 = vunpack.c.l.b16 %v896
    %v968 = vunpack.c.l.b16 %v897
    %v969 = vunpack.c.l.b16 %v898
    %v970 = vunpack.c.l.b16 %v899
    %v971 = vunpack.c.l.b16 %v900
    %v972 = vunpack.c.l.b16 %v901
    %v973 = vunpack.c.l.b16 %v902
    %v974 = vunpack.c.l.b16 %v903
    %v975 = vunpack.c.l.b16 %v904
    %v976 = vunpack.c.l.b16 %v905
    %v977 = vunpack.c.l.b16 %v906
    %v978 = vunpack.c.l.b16 %v907
    %v979 = vunpack.c.l.b16 %v908
    %v980 = vunpack.c.l.b16 %v909
    %v981 = vunpack.c.l.b16 %v910
    %v982 = vpack.c.b16 %v951, %v950
    %v983 = vpack.c.b16 %v953, %v952
    %v984 = vpack.c.b16 %v955, %v954
    %v985 = vpack.c.b16 %v957, %v956
    %v986 = vpack.c.b16 %v959, %v958
    %v987 = vpack.c.b16 %v961, %v960
    %v988 = vpack.c.b16 %v963, %v962
    %v989 = vpack.c.b16 %v965, %v964
    %v990 = vpack.c.b16 %v967, %v966
    %v991 = vpack.c.b16 %v969, %v968
    %v992 = vpack.c.b16 %v971, %v970
    %v993 = vpack.c.b16 %v973, %v972
    %v994 = vpack.c.b16 %v975, %v974
    %v995 = vpack.c.b16 %v977, %v976
    %v996 = vpack.c.b16 %v979, %v978
    %v997 = vpack.c.b16 %v981, %v980
    %1014 = vmatprep.subr.bf16.mxu0 0
    %1015 = vmatpush1.bf16.msra.mxu0 %v989
    %1016 = vmatprep.subr.bf16.mxu0 0
    %1017 = vmatpush1.bf16.msra.mxu0 %v988
    %1018 = vmatprep.subr.bf16.mxu0 0
    %1019 = vmatpush1.bf16.msra.mxu0 %v987
    %1020 = vmatprep.subr.bf16.mxu0 0
    %1021 = vmatpush1.bf16.msra.mxu0 %v986
    %1022 = vmatprep.subr.bf16.mxu0 0
    %1023 = vmatpush1.bf16.msra.mxu0 %v985
    %1024 = vmatprep.subr.bf16.mxu0 0
    %1025 = vmatpush1.bf16.msra.mxu0 %v984
    %1026 = vmatprep.subr.bf16.mxu0 0
    %1027 = vmatpush1.bf16.msra.mxu0 %v983
    %1028 = vmatprep.subr.bf16.mxu0 0
    %1029 = vmatpush1.bf16.msra.mxu0 %v982
    %1030 = vmatprep.subr.bf16.mxu0 0
    %1031 = vmatpush2.bf16.msra.mxu0 %v997
    %1032 = vmatprep.subr.bf16.mxu0 0
    %1033 = vmatpush2.bf16.msra.mxu0 %v996
    %1034 = vmatprep.subr.bf16.mxu0 0
    %1035 = vmatpush2.bf16.msra.mxu0 %v995
    %1036 = vmatprep.subr.bf16.mxu0 0
    %1037 = vmatpush2.bf16.msra.mxu0 %v994
    %1038 = vmatprep.subr.bf16.mxu0 0
    %1039 = vmatpush2.bf16.msra.mxu0 %v993
    %1040 = vmatprep.subr.bf16.mxu0 0
    %1041 = vmatpush2.bf16.msra.mxu0 %v992
    %1042 = vmatprep.subr.bf16.mxu0 0
    %1043 = vmatpush2.bf16.msra.mxu0 %v991
    %1044 = vmatprep.subr.bf16.mxu0 0
    %1045 = vmatpush2.bf16.msra.mxu0 %v990
    %1046 = vmatprep.mubr.bf16.mxu0 %v878
    %1047 = vmatmul.mubr.bf16.gmra.mxu0 %v877
    %v1048 = vpop.f32.mrf.mxu0
    %v1049 = vadd.f32 %v916, %v1048
    %v1050 = vpop.f32.mrf.mxu0
    %v1051 = vpop.f32.mrf.mxu0
    %v1052 = vadd.f32 %v916, %v1051
    %v1053 = vpop.f32.mrf.mxu0
    %1054 = vdwg.mxu0
    %v1055 = vpack.c.bf16 %v1052, %v1049
    %v1056 = vmax.bf16 %v1055, 0
    %v1057 = vld [vmem:[#allocation11] sm:$0xf]
    %v1058 = vld [vmem:[#allocation11 + $0x4] sm:$0xf]
    %v1059 = vld [vmem:[#allocation11 + $0x8] sm:$0xf]
    %v1060 = vld [vmem:[#allocation11 + $0xc] sm:$0xf]
    %v1061 = vld [vmem:[#allocation11 + $0x10] sm:$0xf]
    %v1062 = vld [vmem:[#allocation11 + $0x14] sm:$0xf]
    %v1063 = vld [vmem:[#allocation11 + $0x18] sm:$0xf]
    %v1064 = vld [vmem:[#allocation11 + $0x1c] sm:$0xf]
    %v1065 = vld [vmem:[#allocation11 + $0x20] sm:$0xf]
    %v1066 = vld [vmem:[#allocation11 + $0x24] sm:$0xf]
    %v1067 = vld [vmem:[#allocation11 + $0x28] sm:$0xf]
    %v1068 = vld [vmem:[#allocation11 + $0x2c] sm:$0xf]
    %v1069 = vld [vmem:[#allocation11 + $0x30] sm:$0xf]
    %v1070 = vld [vmem:[#allocation11 + $0x34] sm:$0xf]
    %v1071 = vld [vmem:[#allocation11 + $0x38] sm:$0xf]
    %v1072 = vld [vmem:[#allocation11 + $0x3c] sm:$0xf]
    %v1073 = vld [vmem:[%s9] sm:$0x1]
    %v1075 = vlaneseq
    %v1076 = vshrl.u32 %v1075, 7
    %v1077 = vsub.s32 0, %v1076
    %v1078 = vrot.slane %v1073, %v1077
    %v1096 = vunpack.c.l.b16 %v1057
    %v1097 = vunpack.c.l.b16 %v1058
    %v1098 = vunpack.c.l.b16 %v1059
    %v1099 = vunpack.c.l.b16 %v1060
    %v1100 = vunpack.c.l.b16 %v1061
    %v1101 = vunpack.c.l.b16 %v1062
    %v1102 = vunpack.c.l.b16 %v1063
    %v1103 = vunpack.c.l.b16 %v1064
    %v1104 = vunpack.c.l.b16 %v1065
    %v1105 = vunpack.c.l.b16 %v1066
    %v1106 = vunpack.c.l.b16 %v1067
    %v1107 = vunpack.c.l.b16 %v1068
    %v1108 = vunpack.c.l.b16 %v1069
    %v1109 = vunpack.c.l.b16 %v1070
    %v1110 = vunpack.c.l.b16 %v1071
    %v1111 = vunpack.c.l.b16 %v1072
    %v1112 = vpack.c.b16 %v1097, %v1096
    %v1113 = vpack.c.b16 %v1099, %v1098
    %v1114 = vpack.c.b16 %v1101, %v1100
    %v1115 = vpack.c.b16 %v1103, %v1102
    %v1116 = vpack.c.b16 %v1105, %v1104
    %v1117 = vpack.c.b16 %v1107, %v1106
    %v1118 = vpack.c.b16 %v1109, %v1108
    %v1119 = vpack.c.b16 %v1111, %v1110
    %1128 = vmatprep.subr.bf16.mxu0 0
    %1129 = vmatpush1.bf16.msra.mxu0 %v1119
    %1130 = vmatprep.subr.bf16.mxu0 0
    %1131 = vmatpush1.bf16.msra.mxu0 %v1118
    %1132 = vmatprep.subr.bf16.mxu0 0
    %1133 = vmatpush1.bf16.msra.mxu0 %v1117
    %1134 = vmatprep.subr.bf16.mxu0 0
    %1135 = vmatpush1.bf16.msra.mxu0 %v1116
    %1136 = vmatprep.subr.bf16.mxu0 0
    %1137 = vmatpush1.bf16.msra.mxu0 %v1115
    %1138 = vmatprep.subr.bf16.mxu0 0
    %1139 = vmatpush1.bf16.msra.mxu0 %v1114
    %1140 = vmatprep.subr.bf16.mxu0 0
    %1141 = vmatpush1.bf16.msra.mxu0 %v1113
    %1142 = vmatprep.subr.bf16.mxu0 0
    %1143 = vmatpush1.bf16.msra.mxu0 %v1112
    %1144 = vmatprep.subr.bf16.mxu0 0
    %1145 = vmatpush2.bf16.msra.mxu0 0
    %1146 = vmatprep.subr.bf16.mxu0 0
    %1147 = vmatpush2.bf16.msra.mxu0 0
    %1148 = vmatprep.subr.bf16.mxu0 0
    %1149 = vmatpush2.bf16.msra.mxu0 0
    %1150 = vmatprep.subr.bf16.mxu0 0
    %1151 = vmatpush2.bf16.msra.mxu0 0
    %1152 = vmatprep.subr.bf16.mxu0 0
    %1153 = vmatpush2.bf16.msra.mxu0 0
    %1154 = vmatprep.subr.bf16.mxu0 0
    %1155 = vmatpush2.bf16.msra.mxu0 0
    %1156 = vmatprep.subr.bf16.mxu0 0
    %1157 = vmatpush2.bf16.msra.mxu0 0
    %1158 = vmatprep.subr.bf16.mxu0 0
    %1159 = vmatpush2.bf16.msra.mxu0 0
    %1160 = vmatprep.mubr.bf16.mxu0 0
    %1161 = vmatmul.mubr.bf16.gmra.mxu0 %v1056
    %v1162 = vpop.f32.mrf.mxu0
    %v1163 = vadd.f32 %v1078, %v1162
    %v1164 = vpop.f32.mrf.mxu0
    %v1165 = vpop.f32.mrf.mxu0
    %v1166 = vadd.f32 %v1078, %v1165
    %v1167 = vpop.f32.mrf.mxu0
    %1168 = vdwg.mxu0
    %v1169 = vpack.c.bf16 %v1166, %v1163
    %v1170 = vmax.bf16 %v1169, 0
    %v1171 = vld [vmem:[#allocation12] sm:$0xf]
    %v1172 = vld [vmem:[#allocation12 + $0x4] sm:$0xf]
    %v1173 = vld [vmem:[#allocation12 + $0x8] sm:$0xf]
    %v1174 = vld [vmem:[#allocation12 + $0xc] sm:$0xf]
    %v1175 = vld [vmem:[#allocation12 + $0x10] sm:$0xf]
    %v1176 = vld [vmem:[#allocation12 + $0x14] sm:$0xf]
    %v1177 = vld [vmem:[#allocation12 + $0x18] sm:$0xf]
    %v1178 = vld [vmem:[#allocation12 + $0x1c] sm:$0xf]
    %v1179 = vld [vmem:[#allocation12 + $0x20] sm:$0xf]
    %v1180 = vld [vmem:[#allocation12 + $0x24] sm:$0xf]
    %v1181 = vld [vmem:[#allocation12 + $0x28] sm:$0xf]
    %v1182 = vld [vmem:[#allocation12 + $0x2c] sm:$0xf]
    %v1183 = vld [vmem:[#allocation12 + $0x30] sm:$0xf]
    %v1184 = vld [vmem:[#allocation12 + $0x34] sm:$0xf]
    %v1185 = vld [vmem:[#allocation12 + $0x38] sm:$0xf]
    %v1186 = vld [vmem:[#allocation12 + $0x3c] sm:$0xf]
    %v1187 = vld [vmem:[%s11] sm:$0x1]
    %v1189 = vlaneseq
    %v1190 = vshrl.u32 %v1189, 7
    %v1191 = vsub.s32 0, %v1190
    %v1192 = vrot.slane %v1187, %v1191
    %v1210 = vunpack.c.l.b16 %v1171
    %v1211 = vunpack.c.l.b16 %v1172
    %v1212 = vunpack.c.l.b16 %v1173
    %v1213 = vunpack.c.l.b16 %v1174
    %v1214 = vunpack.c.l.b16 %v1175
    %v1215 = vunpack.c.l.b16 %v1176
    %v1216 = vunpack.c.l.b16 %v1177
    %v1217 = vunpack.c.l.b16 %v1178
    %v1218 = vunpack.c.l.b16 %v1179
    %v1219 = vunpack.c.l.b16 %v1180
    %v1220 = vunpack.c.l.b16 %v1181
    %v1221 = vunpack.c.l.b16 %v1182
    %v1222 = vunpack.c.l.b16 %v1183
    %v1223 = vunpack.c.l.b16 %v1184
    %v1224 = vunpack.c.l.b16 %v1185
    %v1225 = vunpack.c.l.b16 %v1186
    %v1226 = vpack.c.b16 %v1211, %v1210
    %v1227 = vpack.c.b16 %v1213, %v1212
    %v1228 = vpack.c.b16 %v1215, %v1214
    %v1229 = vpack.c.b16 %v1217, %v1216
    %v1230 = vpack.c.b16 %v1219, %v1218
    %v1231 = vpack.c.b16 %v1221, %v1220
    %v1232 = vpack.c.b16 %v1223, %v1222
    %v1233 = vpack.c.b16 %v1225, %v1224
    %1242 = vmatprep.subr.bf16.mxu0 0
    %1243 = vmatpush1.bf16.msra.mxu0 %v1233
    %1244 = vmatprep.subr.bf16.mxu0 0
    %1245 = vmatpush1.bf16.msra.mxu0 %v1232
    %1246 = vmatprep.subr.bf16.mxu0 0
    %1247 = vmatpush1.bf16.msra.mxu0 %v1231
    %1248 = vmatprep.subr.bf16.mxu0 0
    %1249 = vmatpush1.bf16.msra.mxu0 %v1230
    %1250 = vmatprep.subr.bf16.mxu0 0
    %1251 = vmatpush1.bf16.msra.mxu0 %v1229
    %1252 = vmatprep.subr.bf16.mxu0 0
    %1253 = vmatpush1.bf16.msra.mxu0 %v1228
    %1254 = vmatprep.subr.bf16.mxu0 0
    %1255 = vmatpush1.bf16.msra.mxu0 %v1227
    %1256 = vmatprep.subr.bf16.mxu0 0
    %1257 = vmatpush1.bf16.msra.mxu0 %v1226
    %1258 = vmatprep.subr.bf16.mxu0 0
    %1259 = vmatpush2.bf16.msra.mxu0 0
    %1260 = vmatprep.subr.bf16.mxu0 0
    %1261 = vmatpush2.bf16.msra.mxu0 0
    %1262 = vmatprep.subr.bf16.mxu0 0
    %1263 = vmatpush2.bf16.msra.mxu0 0
    %1264 = vmatprep.subr.bf16.mxu0 0
    %1265 = vmatpush2.bf16.msra.mxu0 0
    %1266 = vmatprep.subr.bf16.mxu0 0
    %1267 = vmatpush2.bf16.msra.mxu0 0
    %1268 = vmatprep.subr.bf16.mxu0 0
    %1269 = vmatpush2.bf16.msra.mxu0 0
    %1270 = vmatprep.subr.bf16.mxu0 0
    %1271 = vmatpush2.bf16.msra.mxu0 0
    %1272 = vmatprep.subr.bf16.mxu0 0
    %1273 = vmatpush2.bf16.msra.mxu0 0
    %1274 = vmatprep.mubr.bf16.mxu0 0
    %1275 = vmatmul.mubr.bf16.gmra.mxu0 %v1170
    %v1276 = vpop.f32.mrf.mxu0
    %v1277 = vadd.f32 %v1192, %v1276
    %v1278 = vpop.f32.mrf.mxu0
    %v1279 = vpop.f32.mrf.mxu0
    %v1280 = vadd.f32 %v1192, %v1279
    %v1281 = vpop.f32.mrf.mxu0
    %1282 = vdwg.mxu0
    %v1283 = vpack.c.bf16 %v1280, %v1277
    %v1285 = vunpack.c.l.b16 %v1283
    %v1286 = vunpack.c.h.b16 %v1283
    %v1287 = vpack.c.b16 %v1285, %v1285
    %v1288 = vpack.c.b16 %v1286, %v1286
    %1291 = vst [vmem:[#allocation14] sm:$0xf] %v1287
    %1292 = vst [vmem:[#allocation14 + $0x4] sm:$0xf] %v1288
    // Predicated region
    $region74: #{tpu_custom_call.1} parent=1 // pred_check
      _
    $region75: #{tpu_custom_call.1} parent=1 // pred_check_branch
      %1294 = sbr.rel (0) target = $region77
    $region76: #{tpu_custom_call.1} parent=1 // pred_region
      %s1296 = ssub.s32 128, 128
      %1297 = vsyncadd [#allocation5], %s1296
      %s1298 = sshll.u32 [#allocation14], 4
      %s1299 = int_to_ptr.vmem [resolvable:$true] %s1298
      %1304 = dma.vmem_to_hbm [thread:$0]  %s1299, 128, %s12, [#allocation5], 64, 64, 4
    $region77: #{tpu_custom_call.1} parent=1 // pred_fallthru
      _
    // Predicated region
    $region78: #{tpu_custom_call.1} parent=1 // pred_check
      _
    $region79: #{tpu_custom_call.1} parent=1 // pred_check_branch
      %1306 = sbr.rel (0) target = $region81
    $region80: #{tpu_custom_call.1} parent=1 // pred_region
      %1307 = dma.done [#allocation5], 128
    $region81: #{tpu_custom_call.1} parent=1 // pred_fallthru
      _
    %1308 = vsyncpa [#allocation4], 1
    %1309 = vsyncpa [#allocation7], 1
    %1310 = vsyncpa [#allocation10], 1
    %1311 = vsyncpa [#allocation13], 1
    %1312 = vsyncpa [#allocation5], 1

</llo_original>
